<compile_context>
chip_gen: v7x
topology: tpu7x:2x2x1
jax: 0.10.0
libtpu: 0.0.40
codegen_flags: <defaults>
</compile_context>

<pallas_src>
import jax
import jax.numpy as jnp
from jax.experimental import pallas as pl
from jax.experimental.pallas import tpu as pltpu

N_UNITS = 8                 # hidden width (nUnits)
N_LAYERS = 8                # number of constructed hidden layers (nLayers)
N_HIDDEN = N_UNITS          # forward() applies range(self.nLayers) == range(nUnits) layers

IN_DIM = 4                  # iris features
OUT_DIM = 3                 # iris classes

MAX_TB = 256                # batch tile (M dim of the MXU on v6e/v7x)

# ---- packed parameter slab layout: one (R_TOTAL, N_UNITS) f32 array ----------
OFF_W_IN = 0                                   # rows [0:4]   w_in (4,8); rows [4:8] zero pad
OFF_W_H = 8                                    # layer i ->   rows [8+8i : 16+8i]  (8,8)
OFF_W_OUT = OFF_W_H + N_HIDDEN * N_UNITS       # 72: rows [72:80] w_out, cols [:3] valid
OFF_B_IN = OFF_W_OUT + N_UNITS                 # 80: b_in row
OFF_B_H = OFF_B_IN + 1                         # 81..88: b_h rows
OFF_B_OUT = OFF_B_H + N_HIDDEN                 # 89: b_out row, cols [:3] valid
R_TOTAL = OFF_B_OUT + 1                        # 90 rows total (~2.9 KiB of real data)


def mlp_kernel(x_ref, p_ref, o_ref):
    # x_ref: (TB, 4)   activations tile
    # p_ref: (90, 8)   packed weight/bias slab (resident in VMEM, DMA'd once)
    # o_ref: (TB, 3)   logits tile
    x = x_ref[...]
    w_in = p_ref[OFF_W_IN:OFF_W_IN + IN_DIM, :]          # (4, 8)
    b_in = p_ref[OFF_B_IN:OFF_B_IN + 1, :]               # (1, 8)
    h = jnp.dot(x, w_in, preferred_element_type=jnp.float32) + b_in
    h = jnp.maximum(h, 0.0)                              # F.relu
    for i in range(N_HIDDEN):                            # static unroll, 8 layers
        w = p_ref[OFF_W_H + i * N_UNITS: OFF_W_H + (i + 1) * N_UNITS, :]   # (8, 8)
        b = p_ref[OFF_B_H + i: OFF_B_H + i + 1, :]                         # (1, 8)
        h = jnp.dot(h, w, preferred_element_type=jnp.float32) + b
        h = jnp.maximum(h, 0.0)                          # F.relu
    w_out = p_ref[OFF_W_OUT:OFF_W_OUT + N_UNITS, :]      # (8, 8), cols [:3] valid (rest zero)
    b_out = p_ref[OFF_B_OUT:OFF_B_OUT + 1, :]            # (1, 8)
    out = jnp.dot(h, w_out, preferred_element_type=jnp.float32) + b_out
    o_ref[...] = out[:, :OUT_DIM]                        # no activation on output layer


def init_params(key):
    """Deterministic PyTorch-style U(-1/sqrt(fan_in), 1/sqrt(fan_in)) init,
    stored at their natural (un-padded) shapes, weights as (in, out)."""
    def linear(k, fan_in, fan_out):
        kw, kb = jax.random.split(k)
        bound = 1.0 / float(fan_in) ** 0.5
        w = jax.random.uniform(kw, (fan_in, fan_out), jnp.float32, -bound, bound)
        b = jax.random.uniform(kb, (fan_out,), jnp.float32, -bound, bound)
        return w, b

    keys = jax.random.split(key, 2 + N_HIDDEN)
    w_in, b_in = linear(keys[0], IN_DIM, N_UNITS)
    w_hs, b_hs = [], []
    for i in range(N_HIDDEN):
        w, b = linear(keys[1 + i], N_UNITS, N_UNITS)
        w_hs.append(w)
        b_hs.append(b)
    w_out, b_out = linear(keys[-1], N_UNITS, OUT_DIM)
    return {"w_in": w_in, "b_in": b_in,
            "w_h": jnp.stack(w_hs), "b_h": jnp.stack(b_hs),
            "w_out": w_out, "b_out": b_out}


def pack_params(params):
    """Pack all weights & biases into one (R_TOTAL, N_UNITS) f32 slab."""
    slab = jnp.zeros((R_TOTAL, N_UNITS), jnp.float32)
    slab = slab.at[OFF_W_IN:OFF_W_IN + IN_DIM, :].set(params["w_in"])
    for i in range(N_HIDDEN):
        slab = slab.at[OFF_W_H + i * N_UNITS: OFF_W_H + (i + 1) * N_UNITS, :].set(params["w_h"][i])
    slab = slab.at[OFF_W_OUT:OFF_W_OUT + N_UNITS, :OUT_DIM].set(params["w_out"])
    slab = slab.at[OFF_B_IN, :].set(params["b_in"])
    slab = slab.at[OFF_B_H:OFF_B_H + N_HIDDEN, :].set(params["b_h"])
    slab = slab.at[OFF_B_OUT, :OUT_DIM].set(params["b_out"])
    return slab


@jax.jit
def ann_iris_forward(x, slab):
    """x: (B, 4) float32, slab: packed params  ->  (B, 3) float32 logits."""
    x = x.astype(jnp.float32)
    B = x.shape[0]
    Bp = -(-B // 8) * 8                 # round batch up to a sublane multiple
    TB = min(MAX_TB, Bp)                # batch tile (>=256 fills the MXU M dim when B is large)
    Bp = -(-Bp // TB) * TB              # round up to a multiple of the tile
    if Bp != B:
        x = jnp.zeros((Bp, IN_DIM), jnp.float32).at[:B].set(x)

    out = pl.pallas_call(
        mlp_kernel,
        out_shape=jax.ShapeDtypeStruct((Bp, OUT_DIM), jnp.float32),
        grid=(Bp // TB,),
        in_specs=[
            pl.BlockSpec((TB, IN_DIM), lambda i: (i, 0)),        # activations: tiled over batch
            pl.BlockSpec((R_TOTAL, N_UNITS), lambda i: (0, 0)),  # weight slab: pinned, DMA'd once
        ],
        out_specs=pl.BlockSpec((TB, OUT_DIM), lambda i: (i, 0)),
        compiler_params=pltpu.CompilerParams(
            dimension_semantics=("parallel",),   # shards batch across v7x's 2 TensorCores
        ),
    )(x, slab)

    return out[:B] if Bp != B else out


def ann_iris_reference(x, params):
    """Pure-JAX reference of the same forward pass (for correctness check)."""
    h = jnp.maximum(x @ params["w_in"] + params["b_in"], 0.0)
    for i in range(N_HIDDEN):
        h = jnp.maximum(h @ params["w_h"][i] + params["b_h"][i], 0.0)
    return h @ params["w_out"] + params["b_out"]


if __name__ == "__main__":
    key = jax.random.PRNGKey(0)
    k_x, k_p = jax.random.split(key)
    x = jax.random.normal(k_x, (2, IN_DIM), dtype=jnp.float32)   # batch=2, 4 iris features
    params = init_params(k_p)
    slab = pack_params(params)

    out = ann_iris_forward(x, slab)
    out = jax.block_until_ready(out)

    ref = ann_iris_reference(x, params)
    assert out.shape == (2, OUT_DIM)
    assert jnp.allclose(out, ref, atol=1e-5, rtol=1e-5), "mismatch vs pure-JAX reference"

    print("KERNEL_OK")
</pallas_src>

<mosaic_0001>
module attributes {stable_mosaic.version = 11 : i64} {
  func.func @mlp_kernel(%arg0: i32, %arg1: memref<8x4xf32, #tpu.memory_space<vmem>>, %arg2: memref<90x8xf32, #tpu.memory_space<vmem>>, %arg3: memref<8x3xf32, #tpu.memory_space<vmem>>) attributes {dimension_semantics = [#tpu.dimension_semantics<parallel>], iteration_bounds = array<i64: 1>, scalar_prefetch = 0 : i64, scratch_operands = 0 : i64, tpu.core_type = #tpu.core_type<tc>, window_params = [{transform_indices = @transform_0, window_bounds = array<i64: 8, 4>}, {pipeline_mode = #tpu.pipeline_mode<synchronous>, transform_indices = @transform_1, window_bounds = array<i64: 90, 8>}, {transform_indices = @transform_2, window_bounds = array<i64: 8, 3>}]} {
    %c0 = arith.constant 0 : index
    %c0_0 = arith.constant 0 : index
    %0 = vector.load %arg1[%c0, %c0_0] : memref<8x4xf32, #tpu.memory_space<vmem>>, vector<8x4xf32>
    %c0_1 = arith.constant 0 : index
    %c0_2 = arith.constant 0 : index
    %1 = vector.load %arg2[%c0_1, %c0_2] : memref<90x8xf32, #tpu.memory_space<vmem>>, vector<4x8xf32>
    %c80 = arith.constant 80 : index
    %c0_3 = arith.constant 0 : index
    %2 = vector.load %arg2[%c80, %c0_3] : memref<90x8xf32, #tpu.memory_space<vmem>>, vector<1x8xf32>
    %cst = arith.constant dense<0.000000e+00> : vector<8x8xf32>
    %3 = tpu.matmul %0, %1, %cst {dimension_numbers = #tpu.dot_dimension_numbers<[1], [0], [0], [1], [0, 0, 1, 1], [], []>} : vector<8x4xf32>, vector<4x8xf32>, vector<8x8xf32> -> vector<8x8xf32>
    %4 = vector.broadcast %2 : vector<1x8xf32> to vector<8x8xf32>
    %5 = arith.addf %3, %4 : vector<8x8xf32>
    %cst_4 = arith.constant 0.000000e+00 : f32
    %6 = vector.broadcast %cst_4 : f32 to vector<8x8xf32>
    %7 = arith.maximumf %5, %6 : vector<8x8xf32>
    %c8 = arith.constant 8 : index
    %c0_5 = arith.constant 0 : index
    %8 = vector.load %arg2[%c8, %c0_5] : memref<90x8xf32, #tpu.memory_space<vmem>>, vector<8x8xf32>
    %c81 = arith.constant 81 : index
    %c0_6 = arith.constant 0 : index
    %9 = vector.load %arg2[%c81, %c0_6] : memref<90x8xf32, #tpu.memory_space<vmem>>, vector<1x8xf32>
    %cst_7 = arith.constant dense<0.000000e+00> : vector<8x8xf32>
    %10 = tpu.matmul %7, %8, %cst_7 {dimension_numbers = #tpu.dot_dimension_numbers<[1], [0], [0], [1], [0, 0, 1, 1], [], []>} : vector<8x8xf32>, vector<8x8xf32>, vector<8x8xf32> -> vector<8x8xf32>
    %11 = vector.broadcast %9 : vector<1x8xf32> to vector<8x8xf32>
    %12 = arith.addf %10, %11 : vector<8x8xf32>
    %cst_8 = arith.constant 0.000000e+00 : f32
    %13 = vector.broadcast %cst_8 : f32 to vector<8x8xf32>
    %14 = arith.maximumf %12, %13 : vector<8x8xf32>
    %c16 = arith.constant 16 : index
    %c0_9 = arith.constant 0 : index
    %15 = vector.load %arg2[%c16, %c0_9] : memref<90x8xf32, #tpu.memory_space<vmem>>, vector<8x8xf32>
    %c82 = arith.constant 82 : index
    %c0_10 = arith.constant 0 : index
    %16 = vector.load %arg2[%c82, %c0_10] : memref<90x8xf32, #tpu.memory_space<vmem>>, vector<1x8xf32>
    %cst_11 = arith.constant dense<0.000000e+00> : vector<8x8xf32>
    %17 = tpu.matmul %14, %15, %cst_11 {dimension_numbers = #tpu.dot_dimension_numbers<[1], [0], [0], [1], [0, 0, 1, 1], [], []>} : vector<8x8xf32>, vector<8x8xf32>, vector<8x8xf32> -> vector<8x8xf32>
    %18 = vector.broadcast %16 : vector<1x8xf32> to vector<8x8xf32>
    %19 = arith.addf %17, %18 : vector<8x8xf32>
    %cst_12 = arith.constant 0.000000e+00 : f32
    %20 = vector.broadcast %cst_12 : f32 to vector<8x8xf32>
    %21 = arith.maximumf %19, %20 : vector<8x8xf32>
    %c24 = arith.constant 24 : index
    %c0_13 = arith.constant 0 : index
    %22 = vector.load %arg2[%c24, %c0_13] : memref<90x8xf32, #tpu.memory_space<vmem>>, vector<8x8xf32>
    %c83 = arith.constant 83 : index
    %c0_14 = arith.constant 0 : index
    %23 = vector.load %arg2[%c83, %c0_14] : memref<90x8xf32, #tpu.memory_space<vmem>>, vector<1x8xf32>
    %cst_15 = arith.constant dense<0.000000e+00> : vector<8x8xf32>
    %24 = tpu.matmul %21, %22, %cst_15 {dimension_numbers = #tpu.dot_dimension_numbers<[1], [0], [0], [1], [0, 0, 1, 1], [], []>} : vector<8x8xf32>, vector<8x8xf32>, vector<8x8xf32> -> vector<8x8xf32>
    %25 = vector.broadcast %23 : vector<1x8xf32> to vector<8x8xf32>
    %26 = arith.addf %24, %25 : vector<8x8xf32>
    %cst_16 = arith.constant 0.000000e+00 : f32
    %27 = vector.broadcast %cst_16 : f32 to vector<8x8xf32>
    %28 = arith.maximumf %26, %27 : vector<8x8xf32>
    %c32 = arith.constant 32 : index
    %c0_17 = arith.constant 0 : index
    %29 = vector.load %arg2[%c32, %c0_17] : memref<90x8xf32, #tpu.memory_space<vmem>>, vector<8x8xf32>
    %c84 = arith.constant 84 : index
    %c0_18 = arith.constant 0 : index
    %30 = vector.load %arg2[%c84, %c0_18] : memref<90x8xf32, #tpu.memory_space<vmem>>, vector<1x8xf32>
    %cst_19 = arith.constant dense<0.000000e+00> : vector<8x8xf32>
    %31 = tpu.matmul %28, %29, %cst_19 {dimension_numbers = #tpu.dot_dimension_numbers<[1], [0], [0], [1], [0, 0, 1, 1], [], []>} : vector<8x8xf32>, vector<8x8xf32>, vector<8x8xf32> -> vector<8x8xf32>
    %32 = vector.broadcast %30 : vector<1x8xf32> to vector<8x8xf32>
    %33 = arith.addf %31, %32 : vector<8x8xf32>
    %cst_20 = arith.constant 0.000000e+00 : f32
    %34 = vector.broadcast %cst_20 : f32 to vector<8x8xf32>
    %35 = arith.maximumf %33, %34 : vector<8x8xf32>
    %c40 = arith.constant 40 : index
    %c0_21 = arith.constant 0 : index
    %36 = vector.load %arg2[%c40, %c0_21] : memref<90x8xf32, #tpu.memory_space<vmem>>, vector<8x8xf32>
    %c85 = arith.constant 85 : index
    %c0_22 = arith.constant 0 : index
    %37 = vector.load %arg2[%c85, %c0_22] : memref<90x8xf32, #tpu.memory_space<vmem>>, vector<1x8xf32>
    %cst_23 = arith.constant dense<0.000000e+00> : vector<8x8xf32>
    %38 = tpu.matmul %35, %36, %cst_23 {dimension_numbers = #tpu.dot_dimension_numbers<[1], [0], [0], [1], [0, 0, 1, 1], [], []>} : vector<8x8xf32>, vector<8x8xf32>, vector<8x8xf32> -> vector<8x8xf32>
    %39 = vector.broadcast %37 : vector<1x8xf32> to vector<8x8xf32>
    %40 = arith.addf %38, %39 : vector<8x8xf32>
    %cst_24 = arith.constant 0.000000e+00 : f32
    %41 = vector.broadcast %cst_24 : f32 to vector<8x8xf32>
    %42 = arith.maximumf %40, %41 : vector<8x8xf32>
    %c48 = arith.constant 48 : index
    %c0_25 = arith.constant 0 : index
    %43 = vector.load %arg2[%c48, %c0_25] : memref<90x8xf32, #tpu.memory_space<vmem>>, vector<8x8xf32>
    %c86 = arith.constant 86 : index
    %c0_26 = arith.constant 0 : index
    %44 = vector.load %arg2[%c86, %c0_26] : memref<90x8xf32, #tpu.memory_space<vmem>>, vector<1x8xf32>
    %cst_27 = arith.constant dense<0.000000e+00> : vector<8x8xf32>
    %45 = tpu.matmul %42, %43, %cst_27 {dimension_numbers = #tpu.dot_dimension_numbers<[1], [0], [0], [1], [0, 0, 1, 1], [], []>} : vector<8x8xf32>, vector<8x8xf32>, vector<8x8xf32> -> vector<8x8xf32>
    %46 = vector.broadcast %44 : vector<1x8xf32> to vector<8x8xf32>
    %47 = arith.addf %45, %46 : vector<8x8xf32>
    %cst_28 = arith.constant 0.000000e+00 : f32
    %48 = vector.broadcast %cst_28 : f32 to vector<8x8xf32>
    %49 = arith.maximumf %47, %48 : vector<8x8xf32>
    %c56 = arith.constant 56 : index
    %c0_29 = arith.constant 0 : index
    %50 = vector.load %arg2[%c56, %c0_29] : memref<90x8xf32, #tpu.memory_space<vmem>>, vector<8x8xf32>
    %c87 = arith.constant 87 : index
    %c0_30 = arith.constant 0 : index
    %51 = vector.load %arg2[%c87, %c0_30] : memref<90x8xf32, #tpu.memory_space<vmem>>, vector<1x8xf32>
    %cst_31 = arith.constant dense<0.000000e+00> : vector<8x8xf32>
    %52 = tpu.matmul %49, %50, %cst_31 {dimension_numbers = #tpu.dot_dimension_numbers<[1], [0], [0], [1], [0, 0, 1, 1], [], []>} : vector<8x8xf32>, vector<8x8xf32>, vector<8x8xf32> -> vector<8x8xf32>
    %53 = vector.broadcast %51 : vector<1x8xf32> to vector<8x8xf32>
    %54 = arith.addf %52, %53 : vector<8x8xf32>
    %cst_32 = arith.constant 0.000000e+00 : f32
    %55 = vector.broadcast %cst_32 : f32 to vector<8x8xf32>
    %56 = arith.maximumf %54, %55 : vector<8x8xf32>
    %c64 = arith.constant 64 : index
    %c0_33 = arith.constant 0 : index
    %57 = vector.load %arg2[%c64, %c0_33] : memref<90x8xf32, #tpu.memory_space<vmem>>, vector<8x8xf32>
    %c88 = arith.constant 88 : index
    %c0_34 = arith.constant 0 : index
    %58 = vector.load %arg2[%c88, %c0_34] : memref<90x8xf32, #tpu.memory_space<vmem>>, vector<1x8xf32>
    %cst_35 = arith.constant dense<0.000000e+00> : vector<8x8xf32>
    %59 = tpu.matmul %56, %57, %cst_35 {dimension_numbers = #tpu.dot_dimension_numbers<[1], [0], [0], [1], [0, 0, 1, 1], [], []>} : vector<8x8xf32>, vector<8x8xf32>, vector<8x8xf32> -> vector<8x8xf32>
    %60 = vector.broadcast %58 : vector<1x8xf32> to vector<8x8xf32>
    %61 = arith.addf %59, %60 : vector<8x8xf32>
    %cst_36 = arith.constant 0.000000e+00 : f32
    %62 = vector.broadcast %cst_36 : f32 to vector<8x8xf32>
    %63 = arith.maximumf %61, %62 : vector<8x8xf32>
    %c72 = arith.constant 72 : index
    %c0_37 = arith.constant 0 : index
    %64 = vector.load %arg2[%c72, %c0_37] : memref<90x8xf32, #tpu.memory_space<vmem>>, vector<8x8xf32>
    %c89 = arith.constant 89 : index
    %c0_38 = arith.constant 0 : index
    %65 = vector.load %arg2[%c89, %c0_38] : memref<90x8xf32, #tpu.memory_space<vmem>>, vector<1x8xf32>
    %cst_39 = arith.constant dense<0.000000e+00> : vector<8x8xf32>
    %66 = tpu.matmul %63, %64, %cst_39 {dimension_numbers = #tpu.dot_dimension_numbers<[1], [0], [0], [1], [0, 0, 1, 1], [], []>} : vector<8x8xf32>, vector<8x8xf32>, vector<8x8xf32> -> vector<8x8xf32>
    %67 = vector.broadcast %65 : vector<1x8xf32> to vector<8x8xf32>
    %68 = arith.addf %66, %67 : vector<8x8xf32>
    %69 = vector.extract_strided_slice %68 {offsets = [0, 0], sizes = [8, 3], strides = [1, 1]} : vector<8x8xf32> to vector<8x3xf32>
    %c0_40 = arith.constant 0 : index
    %c0_41 = arith.constant 0 : index
    %70 = vector.load %arg3[%c0_40, %c0_41] : memref<8x3xf32, #tpu.memory_space<vmem>>, vector<8x3xf32>
    tpu.vector_store %arg3[%c0_40, %c0_41], %69 {strides = array<i32>} : memref<8x3xf32, #tpu.memory_space<vmem>>, vector<8x3xf32>,
    return
  }
  func.func @transform_0(%arg0: i32) -> (i32, i32) {
    %c0_i32 = arith.constant 0 : i32
    %c0_i32_0 = arith.constant 0 : i32
    return %arg0, %c0_i32 : i32, i32
  }
  func.func @transform_1(%arg0: i32) -> (i32, i32) {
    %c0_i32 = arith.constant 0 : i32
    %c0_i32_0 = arith.constant 0 : i32
    %c0_i32_1 = arith.constant 0 : i32
    return %c0_i32, %c0_i32_0 : i32, i32
  }
  func.func @transform_2(%arg0: i32) -> (i32, i32) {
    %c0_i32 = arith.constant 0 : i32
    %c0_i32_0 = arith.constant 0 : i32
    return %arg0, %c0_i32 : i32, i32
  }
}

</mosaic_0001>

<llo_original>
// kernel: ann_iris_forward.1
$region0: #{ann_iris_forward.1}
  #allocation0 [shape = 'u32[]', space=smem, size = 0x4, offset = 0x4, fixed_abs, tag = 'smem constant byte address 0x4 - core index']
  #allocation1 [shape = 'u32[144,128]{1,0:T(1,128)}', space=vmem, size = 0x12000, scoped, tag = 'internal scratch']
  %s0 = inlined_call_operand.vmem [shape: f32[8,4], index: 0, kind: input, shape index: {}]
  %s1 = inlined_call_operand.vmem [shape: f32[90,8], index: 1, kind: input, shape index: {}]
  %s2 = inlined_call_operand.vmem [shape: f32[8,3], index: 2, kind: output, shape index: {}]
  %s3 = sld [smem:[#allocation0]]
  $region18: #{ann_iris_forward.1} parent=0
    _
  %s5 = ssub.s32 1, %s3
  %s6 = scalar_select 0, %s5, %s3
  // Predicated region
  $region2: #{ann_iris_forward.1} parent=0 // pred_check
    _
  $region3: #{ann_iris_forward.1} parent=0 // pred_check_branch
    %8 = sbr.rel (0) target = $region5
  $region4: #{ann_iris_forward.1} parent=0 // pred_region
    _
  $region5: #{ann_iris_forward.1} parent=0 // pred_fallthru
    _
  // Predicated region
  $region6: #{ann_iris_forward.1} parent=0 // pred_check
    _
  $region7: #{ann_iris_forward.1} parent=0 // pred_check_branch
    %10 = sbr.rel (0) target = $region9
  $region8: #{ann_iris_forward.1} parent=0 // pred_region
    _
  $region9: #{ann_iris_forward.1} parent=0 // pred_fallthru
    _
  %v11 = vld [vmem:[%s0] sm:$0xff]
  %v12 = vld [vmem:[%s1] sm:$0xf]
  %v13 = vld [vmem:[%s1 + $0x50] sm:$0x1]
  %v14 = vlaneseq
  %v15 = vshrl.u32 %v14, 7
  %v16 = vsub.s32 0, %v15
  %v17 = vrot.slane %v13, %v16
  %vm18 = vcmask 31744
  %v20 = vsel %vm18, %v11, 0
  %vm22 = vcmask 1043456
  %v24 = vsel %vm22, %v12, 0
  %26 = vmatprep.subr.mxu0 0.0
  %27 = vmatpush1.msra.mxu0 %v24
  %28 = vmatprep.subr.mxu0 0.0
  %29 = vmatpush1.msra.mxu0 0.0
  %30 = vmatprep.subr.mxu0 0.0
  %31 = vmatpush1.msra.mxu0 0.0
  %32 = vmatprep.subr.mxu0 0.0
  %33 = vmatpush1.msra.mxu0 0.0
  %34 = vmatprep.subr.mxu0 0.0
  %35 = vmatpush1.msra.mxu0 0.0
  %36 = vmatprep.subr.mxu0 0.0
  %37 = vmatpush1.msra.mxu0 0.0
  %38 = vmatprep.subr.mxu0 0.0
  %39 = vmatpush1.msra.mxu0 0.0
  %40 = vmatprep.subr.mxu0 0.0
  %41 = vmatpush1.msra.mxu0 0.0
  %42 = vmatprep.subr.mxu0 0.0
  %43 = vmatpush1.msra.mxu0 0.0
  %44 = vmatprep.subr.mxu0 0.0
  %45 = vmatpush1.msra.mxu0 0.0
  %46 = vmatprep.subr.mxu0 0.0
  %47 = vmatpush1.msra.mxu0 0.0
  %48 = vmatprep.subr.mxu0 0.0
  %49 = vmatpush1.msra.mxu0 0.0
  %50 = vmatprep.subr.mxu0 0.0
  %51 = vmatpush1.msra.mxu0 0.0
  %52 = vmatprep.subr.mxu0 0.0
  %53 = vmatpush1.msra.mxu0 0.0
  %54 = vmatprep.subr.mxu0 0.0
  %55 = vmatpush1.msra.mxu0 0.0
  %56 = vmatprep.subr.mxu0 0.0
  %57 = vmatpush1.msra.mxu0 0.0
  %58 = vmatprep.subr.mxu0 0.0
  %59 = vmatpush1.msra.mxu0 0.0
  %60 = vmatprep.subr.mxu0 0.0
  %61 = vmatpush1.msra.mxu0 0.0
  %62 = vmatprep.subr.mxu0 0.0
  %63 = vmatpush1.msra.mxu0 0.0
  %64 = vmatprep.subr.mxu0 0.0
  %65 = vmatpush1.msra.mxu0 0.0
  %66 = vmatprep.subr.mxu0 0.0
  %67 = vmatpush1.msra.mxu0 0.0
  %68 = vmatprep.subr.mxu0 0.0
  %69 = vmatpush1.msra.mxu0 0.0
  %70 = vmatprep.subr.mxu0 0.0
  %71 = vmatpush1.msra.mxu0 0.0
  %72 = vmatprep.subr.mxu0 0.0
  %73 = vmatpush1.msra.mxu0 0.0
  %74 = vmatprep.subr.mxu0 0.0
  %75 = vmatpush1.msra.mxu0 0.0
  %76 = vmatprep.subr.mxu0 0.0
  %77 = vmatpush1.msra.mxu0 0.0
  %78 = vmatprep.subr.mxu0 0.0
  %79 = vmatpush1.msra.mxu0 0.0
  %80 = vmatprep.subr.mxu0 0.0
  %81 = vmatpush1.msra.mxu0 0.0
  %82 = vmatprep.subr.mxu0 0.0
  %83 = vmatpush1.msra.mxu0 0.0
  %84 = vmatprep.subr.mxu0 0.0
  %85 = vmatpush1.msra.mxu0 0.0
  %86 = vmatprep.subr.mxu0 0.0
  %87 = vmatpush1.msra.mxu0 0.0
  %88 = vmatprep.subr.mxu0 0.0
  %89 = vmatpush1.msra.mxu0 0.0
  %90 = vmatprep.mubr.f32.mxu0 0.0
  %91 = vmatmul.mubr.f32.gmra.mrb[0].mxu0 %v20
  %v92 = vpop.f32.mrb[0].mxu0
  %v93 = vadd.f32 %v17, %v92
  %v94 = vpop.f32.mrb[0].mxu0
  %95 = vdwg.mxu0
  %v96 = vmax.f32 %v93, 0.0
  %v97 = vld [vmem:[%s1 + $0x8] sm:$0xff]
  %v98 = vld [vmem:[%s1 + $0x51] sm:$0x1]
  %v99 = vlaneseq
  %v100 = vshrl.u32 %v99, 7
  %v101 = vsub.s32 0, %v100
  %v102 = vrot.slane %v98, %v101
  %vm103 = vcmask 64512
  %v105 = vsel %vm103, %v96, 0
  %107 = vmatprep.subr.mxu0 0.0
  %108 = vmatpush1.msra.mxu0 %v97
  %109 = vmatprep.subr.mxu0 0.0
  %110 = vmatpush1.msra.mxu0 0.0
  %111 = vmatprep.subr.mxu0 0.0
  %112 = vmatpush1.msra.mxu0 0.0
  %113 = vmatprep.subr.mxu0 0.0
  %114 = vmatpush1.msra.mxu0 0.0
  %115 = vmatprep.subr.mxu0 0.0
  %116 = vmatpush1.msra.mxu0 0.0
  %117 = vmatprep.subr.mxu0 0.0
  %118 = vmatpush1.msra.mxu0 0.0
  %119 = vmatprep.subr.mxu0 0.0
  %120 = vmatpush1.msra.mxu0 0.0
  %121 = vmatprep.subr.mxu0 0.0
  %122 = vmatpush1.msra.mxu0 0.0
  %123 = vmatprep.subr.mxu0 0.0
  %124 = vmatpush1.msra.mxu0 0.0
  %125 = vmatprep.subr.mxu0 0.0
  %126 = vmatpush1.msra.mxu0 0.0
  %127 = vmatprep.subr.mxu0 0.0
  %128 = vmatpush1.msra.mxu0 0.0
  %129 = vmatprep.subr.mxu0 0.0
  %130 = vmatpush1.msra.mxu0 0.0
  %131 = vmatprep.subr.mxu0 0.0
  %132 = vmatpush1.msra.mxu0 0.0
  %133 = vmatprep.subr.mxu0 0.0
  %134 = vmatpush1.msra.mxu0 0.0
  %135 = vmatprep.subr.mxu0 0.0
  %136 = vmatpush1.msra.mxu0 0.0
  %137 = vmatprep.subr.mxu0 0.0
  %138 = vmatpush1.msra.mxu0 0.0
  %139 = vmatprep.subr.mxu0 0.0
  %140 = vmatpush1.msra.mxu0 0.0
  %141 = vmatprep.subr.mxu0 0.0
  %142 = vmatpush1.msra.mxu0 0.0
  %143 = vmatprep.subr.mxu0 0.0
  %144 = vmatpush1.msra.mxu0 0.0
  %145 = vmatprep.subr.mxu0 0.0
  %146 = vmatpush1.msra.mxu0 0.0
  %147 = vmatprep.subr.mxu0 0.0
  %148 = vmatpush1.msra.mxu0 0.0
  %149 = vmatprep.subr.mxu0 0.0
  %150 = vmatpush1.msra.mxu0 0.0
  %151 = vmatprep.subr.mxu0 0.0
  %152 = vmatpush1.msra.mxu0 0.0
  %153 = vmatprep.subr.mxu0 0.0
  %154 = vmatpush1.msra.mxu0 0.0
  %155 = vmatprep.subr.mxu0 0.0
  %156 = vmatpush1.msra.mxu0 0.0
  %157 = vmatprep.subr.mxu0 0.0
  %158 = vmatpush1.msra.mxu0 0.0
  %159 = vmatprep.subr.mxu0 0.0
  %160 = vmatpush1.msra.mxu0 0.0
  %161 = vmatprep.subr.mxu0 0.0
  %162 = vmatpush1.msra.mxu0 0.0
  %163 = vmatprep.subr.mxu0 0.0
  %164 = vmatpush1.msra.mxu0 0.0
  %165 = vmatprep.subr.mxu0 0.0
  %166 = vmatpush1.msra.mxu0 0.0
  %167 = vmatprep.subr.mxu0 0.0
  %168 = vmatpush1.msra.mxu0 0.0
  %169 = vmatprep.subr.mxu0 0.0
  %170 = vmatpush1.msra.mxu0 0.0
  %171 = vmatprep.mubr.f32.mxu0 0.0
  %172 = vmatmul.mubr.f32.gmra.mrb[0].mxu0 %v105
  %v173 = vpop.f32.mrb[0].mxu0
  %v174 = vadd.f32 %v102, %v173
  %v175 = vpop.f32.mrb[0].mxu0
  %176 = vdwg.mxu0
  %v177 = vmax.f32 %v174, 0.0
  %v178 = vld [vmem:[%s1 + $0x10] sm:$0xff]
  %v179 = vld [vmem:[%s1 + $0x52] sm:$0x1]
  %v180 = vlaneseq
  %v181 = vshrl.u32 %v180, 7
  %v182 = vsub.s32 0, %v181
  %v183 = vrot.slane %v179, %v182
  %v185 = vsel %vm103, %v177, 0
  %187 = vmatprep.subr.mxu0 0.0
  %188 = vmatpush1.msra.mxu0 %v178
  %189 = vmatprep.subr.mxu0 0.0
  %190 = vmatpush1.msra.mxu0 0.0
  %191 = vmatprep.subr.mxu0 0.0
  %192 = vmatpush1.msra.mxu0 0.0
  %193 = vmatprep.subr.mxu0 0.0
  %194 = vmatpush1.msra.mxu0 0.0
  %195 = vmatprep.subr.mxu0 0.0
  %196 = vmatpush1.msra.mxu0 0.0
  %197 = vmatprep.subr.mxu0 0.0
  %198 = vmatpush1.msra.mxu0 0.0
  %199 = vmatprep.subr.mxu0 0.0
  %200 = vmatpush1.msra.mxu0 0.0
  %201 = vmatprep.subr.mxu0 0.0
  %202 = vmatpush1.msra.mxu0 0.0
  %203 = vmatprep.subr.mxu0 0.0
  %204 = vmatpush1.msra.mxu0 0.0
  %205 = vmatprep.subr.mxu0 0.0
  %206 = vmatpush1.msra.mxu0 0.0
  %207 = vmatprep.subr.mxu0 0.0
  %208 = vmatpush1.msra.mxu0 0.0
  %209 = vmatprep.subr.mxu0 0.0
  %210 = vmatpush1.msra.mxu0 0.0
  %211 = vmatprep.subr.mxu0 0.0
  %212 = vmatpush1.msra.mxu0 0.0
  %213 = vmatprep.subr.mxu0 0.0
  %214 = vmatpush1.msra.mxu0 0.0
  %215 = vmatprep.subr.mxu0 0.0
  %216 = vmatpush1.msra.mxu0 0.0
  %217 = vmatprep.subr.mxu0 0.0
  %218 = vmatpush1.msra.mxu0 0.0
  %219 = vmatprep.subr.mxu0 0.0
  %220 = vmatpush1.msra.mxu0 0.0
  %221 = vmatprep.subr.mxu0 0.0
  %222 = vmatpush1.msra.mxu0 0.0
  %223 = vmatprep.subr.mxu0 0.0
  %224 = vmatpush1.msra.mxu0 0.0
  %225 = vmatprep.subr.mxu0 0.0
  %226 = vmatpush1.msra.mxu0 0.0
  %227 = vmatprep.subr.mxu0 0.0
  %228 = vmatpush1.msra.mxu0 0.0
  %229 = vmatprep.subr.mxu0 0.0
  %230 = vmatpush1.msra.mxu0 0.0
  %231 = vmatprep.subr.mxu0 0.0
  %232 = vmatpush1.msra.mxu0 0.0
  %233 = vmatprep.subr.mxu0 0.0
  %234 = vmatpush1.msra.mxu0 0.0
  %235 = vmatprep.subr.mxu0 0.0
  %236 = vmatpush1.msra.mxu0 0.0
  %237 = vmatprep.subr.mxu0 0.0
  %238 = vmatpush1.msra.mxu0 0.0
  %239 = vmatprep.subr.mxu0 0.0
  %240 = vmatpush1.msra.mxu0 0.0
  %241 = vmatprep.subr.mxu0 0.0
  %242 = vmatpush1.msra.mxu0 0.0
  %243 = vmatprep.subr.mxu0 0.0
  %244 = vmatpush1.msra.mxu0 0.0
  %245 = vmatprep.subr.mxu0 0.0
  %246 = vmatpush1.msra.mxu0 0.0
  %247 = vmatprep.subr.mxu0 0.0
  %248 = vmatpush1.msra.mxu0 0.0
  %249 = vmatprep.subr.mxu0 0.0
  %250 = vmatpush1.msra.mxu0 0.0
  %251 = vmatprep.mubr.f32.mxu0 0.0
  %252 = vmatmul.mubr.f32.gmra.mrb[0].mxu0 %v185
  %v253 = vpop.f32.mrb[0].mxu0
  %v254 = vadd.f32 %v183, %v253
  %v255 = vpop.f32.mrb[0].mxu0
  %256 = vdwg.mxu0
  %v257 = vmax.f32 %v254, 0.0
  %v258 = vld [vmem:[%s1 + $0x18] sm:$0xff]
  %v259 = vld [vmem:[%s1 + $0x53] sm:$0x1]
  %v260 = vlaneseq
  %v261 = vshrl.u32 %v260, 7
  %v262 = vsub.s32 0, %v261
  %v263 = vrot.slane %v259, %v262
  %v265 = vsel %vm103, %v257, 0
  %267 = vmatprep.subr.mxu0 0.0
  %268 = vmatpush1.msra.mxu0 %v258
  %269 = vmatprep.subr.mxu0 0.0
  %270 = vmatpush1.msra.mxu0 0.0
  %271 = vmatprep.subr.mxu0 0.0
  %272 = vmatpush1.msra.mxu0 0.0
  %273 = vmatprep.subr.mxu0 0.0
  %274 = vmatpush1.msra.mxu0 0.0
  %275 = vmatprep.subr.mxu0 0.0
  %276 = vmatpush1.msra.mxu0 0.0
  %277 = vmatprep.subr.mxu0 0.0
  %278 = vmatpush1.msra.mxu0 0.0
  %279 = vmatprep.subr.mxu0 0.0
  %280 = vmatpush1.msra.mxu0 0.0
  %281 = vmatprep.subr.mxu0 0.0
  %282 = vmatpush1.msra.mxu0 0.0
  %283 = vmatprep.subr.mxu0 0.0
  %284 = vmatpush1.msra.mxu0 0.0
  %285 = vmatprep.subr.mxu0 0.0
  %286 = vmatpush1.msra.mxu0 0.0
  %287 = vmatprep.subr.mxu0 0.0
  %288 = vmatpush1.msra.mxu0 0.0
  %289 = vmatprep.subr.mxu0 0.0
  %290 = vmatpush1.msra.mxu0 0.0
  %291 = vmatprep.subr.mxu0 0.0
  %292 = vmatpush1.msra.mxu0 0.0
  %293 = vmatprep.subr.mxu0 0.0
  %294 = vmatpush1.msra.mxu0 0.0
  %295 = vmatprep.subr.mxu0 0.0
  %296 = vmatpush1.msra.mxu0 0.0
  %297 = vmatprep.subr.mxu0 0.0
  %298 = vmatpush1.msra.mxu0 0.0
  %299 = vmatprep.subr.mxu0 0.0
  %300 = vmatpush1.msra.mxu0 0.0
  %301 = vmatprep.subr.mxu0 0.0
  %302 = vmatpush1.msra.mxu0 0.0
  %303 = vmatprep.subr.mxu0 0.0
  %304 = vmatpush1.msra.mxu0 0.0
  %305 = vmatprep.subr.mxu0 0.0
  %306 = vmatpush1.msra.mxu0 0.0
  %307 = vmatprep.subr.mxu0 0.0
  %308 = vmatpush1.msra.mxu0 0.0
  %309 = vmatprep.subr.mxu0 0.0
  %310 = vmatpush1.msra.mxu0 0.0
  %311 = vmatprep.subr.mxu0 0.0
  %312 = vmatpush1.msra.mxu0 0.0
  %313 = vmatprep.subr.mxu0 0.0
  %314 = vmatpush1.msra.mxu0 0.0
  %315 = vmatprep.subr.mxu0 0.0
  %316 = vmatpush1.msra.mxu0 0.0
  %317 = vmatprep.subr.mxu0 0.0
  %318 = vmatpush1.msra.mxu0 0.0
  %319 = vmatprep.subr.mxu0 0.0
  %320 = vmatpush1.msra.mxu0 0.0
  %321 = vmatprep.subr.mxu0 0.0
  %322 = vmatpush1.msra.mxu0 0.0
  %323 = vmatprep.subr.mxu0 0.0
  %324 = vmatpush1.msra.mxu0 0.0
  %325 = vmatprep.subr.mxu0 0.0
  %326 = vmatpush1.msra.mxu0 0.0
  %327 = vmatprep.subr.mxu0 0.0
  %328 = vmatpush1.msra.mxu0 0.0
  %329 = vmatprep.subr.mxu0 0.0
  %330 = vmatpush1.msra.mxu0 0.0
  %331 = vmatprep.mubr.f32.mxu0 0.0
  %332 = vmatmul.mubr.f32.gmra.mrb[0].mxu0 %v265
  %v333 = vpop.f32.mrb[0].mxu0
  %v334 = vadd.f32 %v263, %v333
  %v335 = vpop.f32.mrb[0].mxu0
  %336 = vdwg.mxu0
  %v337 = vmax.f32 %v334, 0.0
  %v338 = vld [vmem:[%s1 + $0x20] sm:$0xff]
  %v339 = vld [vmem:[%s1 + $0x54] sm:$0x1]
  %v340 = vlaneseq
  %v341 = vshrl.u32 %v340, 7
  %v342 = vsub.s32 0, %v341
  %v343 = vrot.slane %v339, %v342
  %v345 = vsel %vm103, %v337, 0
  %347 = vmatprep.subr.mxu0 0.0
  %348 = vmatpush1.msra.mxu0 %v338
  %349 = vmatprep.subr.mxu0 0.0
  %350 = vmatpush1.msra.mxu0 0.0
  %351 = vmatprep.subr.mxu0 0.0
  %352 = vmatpush1.msra.mxu0 0.0
  %353 = vmatprep.subr.mxu0 0.0
  %354 = vmatpush1.msra.mxu0 0.0
  %355 = vmatprep.subr.mxu0 0.0
  %356 = vmatpush1.msra.mxu0 0.0
  %357 = vmatprep.subr.mxu0 0.0
  %358 = vmatpush1.msra.mxu0 0.0
  %359 = vmatprep.subr.mxu0 0.0
  %360 = vmatpush1.msra.mxu0 0.0
  %361 = vmatprep.subr.mxu0 0.0
  %362 = vmatpush1.msra.mxu0 0.0
  %363 = vmatprep.subr.mxu0 0.0
  %364 = vmatpush1.msra.mxu0 0.0
  %365 = vmatprep.subr.mxu0 0.0
  %366 = vmatpush1.msra.mxu0 0.0
  %367 = vmatprep.subr.mxu0 0.0
  %368 = vmatpush1.msra.mxu0 0.0
  %369 = vmatprep.subr.mxu0 0.0
  %370 = vmatpush1.msra.mxu0 0.0
  %371 = vmatprep.subr.mxu0 0.0
  %372 = vmatpush1.msra.mxu0 0.0
  %373 = vmatprep.subr.mxu0 0.0
  %374 = vmatpush1.msra.mxu0 0.0
  %375 = vmatprep.subr.mxu0 0.0
  %376 = vmatpush1.msra.mxu0 0.0
  %377 = vmatprep.subr.mxu0 0.0
  %378 = vmatpush1.msra.mxu0 0.0
  %379 = vmatprep.subr.mxu0 0.0
  %380 = vmatpush1.msra.mxu0 0.0
  %381 = vmatprep.subr.mxu0 0.0
  %382 = vmatpush1.msra.mxu0 0.0
  %383 = vmatprep.subr.mxu0 0.0
  %384 = vmatpush1.msra.mxu0 0.0
  %385 = vmatprep.subr.mxu0 0.0
  %386 = vmatpush1.msra.mxu0 0.0
  %387 = vmatprep.subr.mxu0 0.0
  %388 = vmatpush1.msra.mxu0 0.0
  %389 = vmatprep.subr.mxu0 0.0
  %390 = vmatpush1.msra.mxu0 0.0
  %391 = vmatprep.subr.mxu0 0.0
  %392 = vmatpush1.msra.mxu0 0.0
  %393 = vmatprep.subr.mxu0 0.0
  %394 = vmatpush1.msra.mxu0 0.0
  %395 = vmatprep.subr.mxu0 0.0
  %396 = vmatpush1.msra.mxu0 0.0
  %397 = vmatprep.subr.mxu0 0.0
  %398 = vmatpush1.msra.mxu0 0.0
  %399 = vmatprep.subr.mxu0 0.0
  %400 = vmatpush1.msra.mxu0 0.0
  %401 = vmatprep.subr.mxu0 0.0
  %402 = vmatpush1.msra.mxu0 0.0
  %403 = vmatprep.subr.mxu0 0.0
  %404 = vmatpush1.msra.mxu0 0.0
  %405 = vmatprep.subr.mxu0 0.0
  %406 = vmatpush1.msra.mxu0 0.0
  %407 = vmatprep.subr.mxu0 0.0
  %408 = vmatpush1.msra.mxu0 0.0
  %409 = vmatprep.subr.mxu0 0.0
  %410 = vmatpush1.msra.mxu0 0.0
  %411 = vmatprep.mubr.f32.mxu0 0.0
  %412 = vmatmul.mubr.f32.gmra.mrb[0].mxu0 %v345
  %v413 = vpop.f32.mrb[0].mxu0
  %v414 = vadd.f32 %v343, %v413
  %v415 = vpop.f32.mrb[0].mxu0
  %416 = vdwg.mxu0
  %v417 = vmax.f32 %v414, 0.0
  %v418 = vld [vmem:[%s1 + $0x28] sm:$0xff]
  %v419 = vld [vmem:[%s1 + $0x55] sm:$0x1]
  %v420 = vlaneseq
  %v421 = vshrl.u32 %v420, 7
  %v422 = vsub.s32 0, %v421
  %v423 = vrot.slane %v419, %v422
  %v425 = vsel %vm103, %v417, 0
  %427 = vmatprep.subr.mxu0 0.0
  %428 = vmatpush1.msra.mxu0 %v418
  %429 = vmatprep.subr.mxu0 0.0
  %430 = vmatpush1.msra.mxu0 0.0
  %431 = vmatprep.subr.mxu0 0.0
  %432 = vmatpush1.msra.mxu0 0.0
  %433 = vmatprep.subr.mxu0 0.0
  %434 = vmatpush1.msra.mxu0 0.0
  %435 = vmatprep.subr.mxu0 0.0
  %436 = vmatpush1.msra.mxu0 0.0
  %437 = vmatprep.subr.mxu0 0.0
  %438 = vmatpush1.msra.mxu0 0.0
  %439 = vmatprep.subr.mxu0 0.0
  %440 = vmatpush1.msra.mxu0 0.0
  %441 = vmatprep.subr.mxu0 0.0
  %442 = vmatpush1.msra.mxu0 0.0
  %443 = vmatprep.subr.mxu0 0.0
  %444 = vmatpush1.msra.mxu0 0.0
  %445 = vmatprep.subr.mxu0 0.0
  %446 = vmatpush1.msra.mxu0 0.0
  %447 = vmatprep.subr.mxu0 0.0
  %448 = vmatpush1.msra.mxu0 0.0
  %449 = vmatprep.subr.mxu0 0.0
  %450 = vmatpush1.msra.mxu0 0.0
  %451 = vmatprep.subr.mxu0 0.0
  %452 = vmatpush1.msra.mxu0 0.0
  %453 = vmatprep.subr.mxu0 0.0
  %454 = vmatpush1.msra.mxu0 0.0
  %455 = vmatprep.subr.mxu0 0.0
  %456 = vmatpush1.msra.mxu0 0.0
  %457 = vmatprep.subr.mxu0 0.0
  %458 = vmatpush1.msra.mxu0 0.0
  %459 = vmatprep.subr.mxu0 0.0
  %460 = vmatpush1.msra.mxu0 0.0
  %461 = vmatprep.subr.mxu0 0.0
  %462 = vmatpush1.msra.mxu0 0.0
  %463 = vmatprep.subr.mxu0 0.0
  %464 = vmatpush1.msra.mxu0 0.0
  %465 = vmatprep.subr.mxu0 0.0
  %466 = vmatpush1.msra.mxu0 0.0
  %467 = vmatprep.subr.mxu0 0.0
  %468 = vmatpush1.msra.mxu0 0.0
  %469 = vmatprep.subr.mxu0 0.0
  %470 = vmatpush1.msra.mxu0 0.0
  %471 = vmatprep.subr.mxu0 0.0
  %472 = vmatpush1.msra.mxu0 0.0
  %473 = vmatprep.subr.mxu0 0.0
  %474 = vmatpush1.msra.mxu0 0.0
  %475 = vmatprep.subr.mxu0 0.0
  %476 = vmatpush1.msra.mxu0 0.0
  %477 = vmatprep.subr.mxu0 0.0
  %478 = vmatpush1.msra.mxu0 0.0
  %479 = vmatprep.subr.mxu0 0.0
  %480 = vmatpush1.msra.mxu0 0.0
  %481 = vmatprep.subr.mxu0 0.0
  %482 = vmatpush1.msra.mxu0 0.0
  %483 = vmatprep.subr.mxu0 0.0
  %484 = vmatpush1.msra.mxu0 0.0
  %485 = vmatprep.subr.mxu0 0.0
  %486 = vmatpush1.msra.mxu0 0.0
  %487 = vmatprep.subr.mxu0 0.0
  %488 = vmatpush1.msra.mxu0 0.0
  %489 = vmatprep.subr.mxu0 0.0
  %490 = vmatpush1.msra.mxu0 0.0
  %491 = vmatprep.mubr.f32.mxu0 0.0
  %492 = vmatmul.mubr.f32.gmra.mrb[0].mxu0 %v425
  %v493 = vpop.f32.mrb[0].mxu0
  %v494 = vadd.f32 %v423, %v493
  %v495 = vpop.f32.mrb[0].mxu0
  %496 = vdwg.mxu0
  %v497 = vmax.f32 %v494, 0.0
  %v498 = vld [vmem:[%s1 + $0x30] sm:$0xff]
  %v499 = vld [vmem:[%s1 + $0x56] sm:$0x1]
  %v500 = vlaneseq
  %v501 = vshrl.u32 %v500, 7
  %v502 = vsub.s32 0, %v501
  %v503 = vrot.slane %v499, %v502
  %v505 = vsel %vm103, %v497, 0
  %507 = vmatprep.subr.mxu0 0.0
  %508 = vmatpush1.msra.mxu0 %v498
  %509 = vmatprep.subr.mxu0 0.0
  %510 = vmatpush1.msra.mxu0 0.0
  %511 = vmatprep.subr.mxu0 0.0
  %512 = vmatpush1.msra.mxu0 0.0
  %513 = vmatprep.subr.mxu0 0.0
  %514 = vmatpush1.msra.mxu0 0.0
  %515 = vmatprep.subr.mxu0 0.0
  %516 = vmatpush1.msra.mxu0 0.0
  %517 = vmatprep.subr.mxu0 0.0
  %518 = vmatpush1.msra.mxu0 0.0
  %519 = vmatprep.subr.mxu0 0.0
  %520 = vmatpush1.msra.mxu0 0.0
  %521 = vmatprep.subr.mxu0 0.0
  %522 = vmatpush1.msra.mxu0 0.0
  %523 = vmatprep.subr.mxu0 0.0
  %524 = vmatpush1.msra.mxu0 0.0
  %525 = vmatprep.subr.mxu0 0.0
  %526 = vmatpush1.msra.mxu0 0.0
  %527 = vmatprep.subr.mxu0 0.0
  %528 = vmatpush1.msra.mxu0 0.0
  %529 = vmatprep.subr.mxu0 0.0
  %530 = vmatpush1.msra.mxu0 0.0
  %531 = vmatprep.subr.mxu0 0.0
  %532 = vmatpush1.msra.mxu0 0.0
  %533 = vmatprep.subr.mxu0 0.0
  %534 = vmatpush1.msra.mxu0 0.0
  %535 = vmatprep.subr.mxu0 0.0
  %536 = vmatpush1.msra.mxu0 0.0
  %537 = vmatprep.subr.mxu0 0.0
  %538 = vmatpush1.msra.mxu0 0.0
  %539 = vmatprep.subr.mxu0 0.0
  %540 = vmatpush1.msra.mxu0 0.0
  %541 = vmatprep.subr.mxu0 0.0
  %542 = vmatpush1.msra.mxu0 0.0
  %543 = vmatprep.subr.mxu0 0.0
  %544 = vmatpush1.msra.mxu0 0.0
  %545 = vmatprep.subr.mxu0 0.0
  %546 = vmatpush1.msra.mxu0 0.0
  %547 = vmatprep.subr.mxu0 0.0
  %548 = vmatpush1.msra.mxu0 0.0
  %549 = vmatprep.subr.mxu0 0.0
  %550 = vmatpush1.msra.mxu0 0.0
  %551 = vmatprep.subr.mxu0 0.0
  %552 = vmatpush1.msra.mxu0 0.0
  %553 = vmatprep.subr.mxu0 0.0
  %554 = vmatpush1.msra.mxu0 0.0
  %555 = vmatprep.subr.mxu0 0.0
  %556 = vmatpush1.msra.mxu0 0.0
  %557 = vmatprep.subr.mxu0 0.0
  %558 = vmatpush1.msra.mxu0 0.0
  %559 = vmatprep.subr.mxu0 0.0
  %560 = vmatpush1.msra.mxu0 0.0
  %561 = vmatprep.subr.mxu0 0.0
  %562 = vmatpush1.msra.mxu0 0.0
  %563 = vmatprep.subr.mxu0 0.0
  %564 = vmatpush1.msra.mxu0 0.0
  %565 = vmatprep.subr.mxu0 0.0
  %566 = vmatpush1.msra.mxu0 0.0
  %567 = vmatprep.subr.mxu0 0.0
  %568 = vmatpush1.msra.mxu0 0.0
  %569 = vmatprep.subr.mxu0 0.0
  %570 = vmatpush1.msra.mxu0 0.0
  %571 = vmatprep.mubr.f32.mxu0 0.0
  %572 = vmatmul.mubr.f32.gmra.mrb[0].mxu0 %v505
  %v573 = vpop.f32.mrb[0].mxu0
  %v574 = vadd.f32 %v503, %v573
  %v575 = vpop.f32.mrb[0].mxu0
  %576 = vdwg.mxu0
  %v577 = vmax.f32 %v574, 0.0
  %v578 = vld [vmem:[%s1 + $0x38] sm:$0xff]
  %v579 = vld [vmem:[%s1 + $0x57] sm:$0x1]
  %v580 = vlaneseq
  %v581 = vshrl.u32 %v580, 7
  %v582 = vsub.s32 0, %v581
  %v583 = vrot.slane %v579, %v582
  %v585 = vsel %vm103, %v577, 0
  %587 = vmatprep.subr.mxu0 0.0
  %588 = vmatpush1.msra.mxu0 %v578
  %589 = vmatprep.subr.mxu0 0.0
  %590 = vmatpush1.msra.mxu0 0.0
  %591 = vmatprep.subr.mxu0 0.0
  %592 = vmatpush1.msra.mxu0 0.0
  %593 = vmatprep.subr.mxu0 0.0
  %594 = vmatpush1.msra.mxu0 0.0
  %595 = vmatprep.subr.mxu0 0.0
  %596 = vmatpush1.msra.mxu0 0.0
  %597 = vmatprep.subr.mxu0 0.0
  %598 = vmatpush1.msra.mxu0 0.0
  %599 = vmatprep.subr.mxu0 0.0
  %600 = vmatpush1.msra.mxu0 0.0
  %601 = vmatprep.subr.mxu0 0.0
  %602 = vmatpush1.msra.mxu0 0.0
  %603 = vmatprep.subr.mxu0 0.0
  %604 = vmatpush1.msra.mxu0 0.0
  %605 = vmatprep.subr.mxu0 0.0
  %606 = vmatpush1.msra.mxu0 0.0
  %607 = vmatprep.subr.mxu0 0.0
  %608 = vmatpush1.msra.mxu0 0.0
  %609 = vmatprep.subr.mxu0 0.0
  %610 = vmatpush1.msra.mxu0 0.0
  %611 = vmatprep.subr.mxu0 0.0
  %612 = vmatpush1.msra.mxu0 0.0
  %613 = vmatprep.subr.mxu0 0.0
  %614 = vmatpush1.msra.mxu0 0.0
  %615 = vmatprep.subr.mxu0 0.0
  %616 = vmatpush1.msra.mxu0 0.0
  %617 = vmatprep.subr.mxu0 0.0
  %618 = vmatpush1.msra.mxu0 0.0
  %619 = vmatprep.subr.mxu0 0.0
  %620 = vmatpush1.msra.mxu0 0.0
  %621 = vmatprep.subr.mxu0 0.0
  %622 = vmatpush1.msra.mxu0 0.0
  %623 = vmatprep.subr.mxu0 0.0
  %624 = vmatpush1.msra.mxu0 0.0
  %625 = vmatprep.subr.mxu0 0.0
  %626 = vmatpush1.msra.mxu0 0.0
  %627 = vmatprep.subr.mxu0 0.0
  %628 = vmatpush1.msra.mxu0 0.0
  %629 = vmatprep.subr.mxu0 0.0
  %630 = vmatpush1.msra.mxu0 0.0
  %631 = vmatprep.subr.mxu0 0.0
  %632 = vmatpush1.msra.mxu0 0.0
  %633 = vmatprep.subr.mxu0 0.0
  %634 = vmatpush1.msra.mxu0 0.0
  %635 = vmatprep.subr.mxu0 0.0
  %636 = vmatpush1.msra.mxu0 0.0
  %637 = vmatprep.subr.mxu0 0.0
  %638 = vmatpush1.msra.mxu0 0.0
  %639 = vmatprep.subr.mxu0 0.0
  %640 = vmatpush1.msra.mxu0 0.0
  %641 = vmatprep.subr.mxu0 0.0
  %642 = vmatpush1.msra.mxu0 0.0
  %643 = vmatprep.subr.mxu0 0.0
  %644 = vmatpush1.msra.mxu0 0.0
  %645 = vmatprep.subr.mxu0 0.0
  %646 = vmatpush1.msra.mxu0 0.0
  %647 = vmatprep.subr.mxu0 0.0
  %648 = vmatpush1.msra.mxu0 0.0
  %649 = vmatprep.subr.mxu0 0.0
  %650 = vmatpush1.msra.mxu0 0.0
  %651 = vmatprep.mubr.f32.mxu0 0.0
  %652 = vmatmul.mubr.f32.gmra.mrb[0].mxu0 %v585
  %v653 = vpop.f32.mrb[0].mxu0
  %v654 = vadd.f32 %v583, %v653
  %v655 = vpop.f32.mrb[0].mxu0
  %656 = vdwg.mxu0
  %v657 = vmax.f32 %v654, 0.0
  %v658 = vld [vmem:[%s1 + $0x40] sm:$0xff]
  %v659 = vld [vmem:[%s1 + $0x58] sm:$0x1]
  %v660 = vlaneseq
  %v661 = vshrl.u32 %v660, 7
  %v662 = vsub.s32 0, %v661
  %v663 = vrot.slane %v659, %v662
  %v665 = vsel %vm103, %v657, 0
  %667 = vmatprep.subr.mxu0 0.0
  %668 = vmatpush1.msra.mxu0 %v658
  %669 = vmatprep.subr.mxu0 0.0
  %670 = vmatpush1.msra.mxu0 0.0
  %671 = vmatprep.subr.mxu0 0.0
  %672 = vmatpush1.msra.mxu0 0.0
  %673 = vmatprep.subr.mxu0 0.0
  %674 = vmatpush1.msra.mxu0 0.0
  %675 = vmatprep.subr.mxu0 0.0
  %676 = vmatpush1.msra.mxu0 0.0
  %677 = vmatprep.subr.mxu0 0.0
  %678 = vmatpush1.msra.mxu0 0.0
  %679 = vmatprep.subr.mxu0 0.0
  %680 = vmatpush1.msra.mxu0 0.0
  %681 = vmatprep.subr.mxu0 0.0
  %682 = vmatpush1.msra.mxu0 0.0
  %683 = vmatprep.subr.mxu0 0.0
  %684 = vmatpush1.msra.mxu0 0.0
  %685 = vmatprep.subr.mxu0 0.0
  %686 = vmatpush1.msra.mxu0 0.0
  %687 = vmatprep.subr.mxu0 0.0
  %688 = vmatpush1.msra.mxu0 0.0
  %689 = vmatprep.subr.mxu0 0.0
  %690 = vmatpush1.msra.mxu0 0.0
  %691 = vmatprep.subr.mxu0 0.0
  %692 = vmatpush1.msra.mxu0 0.0
  %693 = vmatprep.subr.mxu0 0.0
  %694 = vmatpush1.msra.mxu0 0.0
  %695 = vmatprep.subr.mxu0 0.0
  %696 = vmatpush1.msra.mxu0 0.0
  %697 = vmatprep.subr.mxu0 0.0
  %698 = vmatpush1.msra.mxu0 0.0
  %699 = vmatprep.subr.mxu0 0.0
  %700 = vmatpush1.msra.mxu0 0.0
  %701 = vmatprep.subr.mxu0 0.0
  %702 = vmatpush1.msra.mxu0 0.0
  %703 = vmatprep.subr.mxu0 0.0
  %704 = vmatpush1.msra.mxu0 0.0
  %705 = vmatprep.subr.mxu0 0.0
  %706 = vmatpush1.msra.mxu0 0.0
  %707 = vmatprep.subr.mxu0 0.0
  %708 = vmatpush1.msra.mxu0 0.0
  %709 = vmatprep.subr.mxu0 0.0
  %710 = vmatpush1.msra.mxu0 0.0
  %711 = vmatprep.subr.mxu0 0.0
  %712 = vmatpush1.msra.mxu0 0.0
  %713 = vmatprep.subr.mxu0 0.0
  %714 = vmatpush1.msra.mxu0 0.0
  %715 = vmatprep.subr.mxu0 0.0
  %716 = vmatpush1.msra.mxu0 0.0
  %717 = vmatprep.subr.mxu0 0.0
  %718 = vmatpush1.msra.mxu0 0.0
  %719 = vmatprep.subr.mxu0 0.0
  %720 = vmatpush1.msra.mxu0 0.0
  %721 = vmatprep.subr.mxu0 0.0
  %722 = vmatpush1.msra.mxu0 0.0
  %723 = vmatprep.subr.mxu0 0.0
  %724 = vmatpush1.msra.mxu0 0.0
  %725 = vmatprep.subr.mxu0 0.0
  %726 = vmatpush1.msra.mxu0 0.0
  %727 = vmatprep.subr.mxu0 0.0
  %728 = vmatpush1.msra.mxu0 0.0
  %729 = vmatprep.subr.mxu0 0.0
  %730 = vmatpush1.msra.mxu0 0.0
  %731 = vmatprep.mubr.f32.mxu0 0.0
  %732 = vmatmul.mubr.f32.gmra.mrb[0].mxu0 %v665
  %v733 = vpop.f32.mrb[0].mxu0
  %v734 = vadd.f32 %v663, %v733
  %v735 = vpop.f32.mrb[0].mxu0
  %736 = vdwg.mxu0
  %v737 = vmax.f32 %v734, 0.0
  %v738 = vld [vmem:[%s1 + $0x48] sm:$0xff]
  %v739 = vld [vmem:[%s1 + $0x59] sm:$0x1]
  %v740 = vlaneseq
  %v741 = vshrl.u32 %v740, 7
  %v742 = vsub.s32 0, %v741
  %v743 = vrot.slane %v739, %v742
  %v745 = vsel %vm103, %v737, 0
  %747 = vmatprep.subr.mxu0 0.0
  %748 = vmatpush1.msra.mxu0 %v738
  %749 = vmatprep.subr.mxu0 0.0
  %750 = vmatpush1.msra.mxu0 0.0
  %751 = vmatprep.subr.mxu0 0.0
  %752 = vmatpush1.msra.mxu0 0.0
  %753 = vmatprep.subr.mxu0 0.0
  %754 = vmatpush1.msra.mxu0 0.0
  %755 = vmatprep.subr.mxu0 0.0
  %756 = vmatpush1.msra.mxu0 0.0
  %757 = vmatprep.subr.mxu0 0.0
  %758 = vmatpush1.msra.mxu0 0.0
  %759 = vmatprep.subr.mxu0 0.0
  %760 = vmatpush1.msra.mxu0 0.0
  %761 = vmatprep.subr.mxu0 0.0
  %762 = vmatpush1.msra.mxu0 0.0
  %763 = vmatprep.subr.mxu0 0.0
  %764 = vmatpush1.msra.mxu0 0.0
  %765 = vmatprep.subr.mxu0 0.0
  %766 = vmatpush1.msra.mxu0 0.0
  %767 = vmatprep.subr.mxu0 0.0
  %768 = vmatpush1.msra.mxu0 0.0
  %769 = vmatprep.subr.mxu0 0.0
  %770 = vmatpush1.msra.mxu0 0.0
  %771 = vmatprep.subr.mxu0 0.0
  %772 = vmatpush1.msra.mxu0 0.0
  %773 = vmatprep.subr.mxu0 0.0
  %774 = vmatpush1.msra.mxu0 0.0
  %775 = vmatprep.subr.mxu0 0.0
  %776 = vmatpush1.msra.mxu0 0.0
  %777 = vmatprep.subr.mxu0 0.0
  %778 = vmatpush1.msra.mxu0 0.0
  %779 = vmatprep.subr.mxu0 0.0
  %780 = vmatpush1.msra.mxu0 0.0
  %781 = vmatprep.subr.mxu0 0.0
  %782 = vmatpush1.msra.mxu0 0.0
  %783 = vmatprep.subr.mxu0 0.0
  %784 = vmatpush1.msra.mxu0 0.0
  %785 = vmatprep.subr.mxu0 0.0
  %786 = vmatpush1.msra.mxu0 0.0
  %787 = vmatprep.subr.mxu0 0.0
  %788 = vmatpush1.msra.mxu0 0.0
  %789 = vmatprep.subr.mxu0 0.0
  %790 = vmatpush1.msra.mxu0 0.0
  %791 = vmatprep.subr.mxu0 0.0
  %792 = vmatpush1.msra.mxu0 0.0
  %793 = vmatprep.subr.mxu0 0.0
  %794 = vmatpush1.msra.mxu0 0.0
  %795 = vmatprep.subr.mxu0 0.0
  %796 = vmatpush1.msra.mxu0 0.0
  %797 = vmatprep.subr.mxu0 0.0
  %798 = vmatpush1.msra.mxu0 0.0
  %799 = vmatprep.subr.mxu0 0.0
  %800 = vmatpush1.msra.mxu0 0.0
  %801 = vmatprep.subr.mxu0 0.0
  %802 = vmatpush1.msra.mxu0 0.0
  %803 = vmatprep.subr.mxu0 0.0
  %804 = vmatpush1.msra.mxu0 0.0
  %805 = vmatprep.subr.mxu0 0.0
  %806 = vmatpush1.msra.mxu0 0.0
  %807 = vmatprep.subr.mxu0 0.0
  %808 = vmatpush1.msra.mxu0 0.0
  %809 = vmatprep.subr.mxu0 0.0
  %810 = vmatpush1.msra.mxu0 0.0
  %811 = vmatprep.mubr.f32.mxu0 0.0
  %812 = vmatmul.mubr.f32.gmra.mrb[0].mxu0 %v745
  %v813 = vpop.f32.mrb[0].mxu0
  %v814 = vadd.f32 %v743, %v813
  %v815 = vpop.f32.mrb[0].mxu0
  %816 = vdwg.mxu0
  %vm817 = vcmask 23552
  %818 = vst.msk [vmem:[%s2] sm:$0xff] %vm817, %v814
  // Predicated region
  $region10: #{ann_iris_forward.1} parent=0 // pred_check
    _
  $region11: #{ann_iris_forward.1} parent=0 // pred_check_branch
    %820 = sbr.rel (0) target = $region13
  $region12: #{ann_iris_forward.1} parent=0 // pred_region
    _
  $region13: #{ann_iris_forward.1} parent=0 // pred_fallthru
    _
  // Predicated region
  $region14: #{ann_iris_forward.1} parent=0 // pred_check
    _
  $region15: #{ann_iris_forward.1} parent=0 // pred_check_branch
    %822 = sbr.rel (0) target = $region17
  $region16: #{ann_iris_forward.1} parent=0 // pred_region
    _
  $region17: #{ann_iris_forward.1} parent=0 // pred_fallthru
    _

</llo_original>
